<compile_context>
chip_gen: v6e
topology: v6e:2x2x1
jax: 0.10.0
libtpu: 0.0.40
codegen_flags: <defaults>
</compile_context>

<pallas_src>
import functools

import jax
import jax.numpy as jnp
from jax.experimental import pallas as pl
from jax.experimental.pallas import tpu as pltpu


# ---------------------------------------------------------------------------
# Kernel 1: EMA teacher update + bf16 weight copies (runs once per step).
# ---------------------------------------------------------------------------
def _ema_cast_kernel(alpha,
                     w1_ref, b1_ref, w2_ref, b2_ref,
                     mw1_ref, mb1_ref, mw2_ref, mb2_ref,
                     nmw1_ref, nmb1_ref, nmw2_ref, nmb2_ref,
                     w1bf_ref, w2bf_ref, nmw1bf_ref, nmw2bf_ref):
    one_m_a = 1.0 - alpha
    # EMA stays in f32: with alpha=0.999 the (1-alpha)*p increment is below
    # bf16 relative precision, so the master teacher copy must be f32.
    nmw1 = alpha * mw1_ref[...] + one_m_a * w1_ref[...]
    nmb1 = alpha * mb1_ref[...] + one_m_a * b1_ref[...]
    nmw2 = alpha * mw2_ref[...] + one_m_a * w2_ref[...]
    nmb2 = alpha * mb2_ref[...] + one_m_a * b2_ref[...]
    nmw1_ref[...] = nmw1
    nmb1_ref[...] = nmb1
    nmw2_ref[...] = nmw2
    nmb2_ref[...] = nmb2
    # bf16 copies of the matmul weights (MXU operands).  Biases stay f32.
    w1bf_ref[...] = w1_ref[...].astype(jnp.bfloat16)
    w2bf_ref[...] = w2_ref[...].astype(jnp.bfloat16)
    nmw1bf_ref[...] = nmw1.astype(jnp.bfloat16)
    nmw2bf_ref[...] = nmw2.astype(jnp.bfloat16)


# ---------------------------------------------------------------------------
# Kernel 2: batch-tiled forward(s).  bf16 MXU matmuls, f32 accumulation.
# ---------------------------------------------------------------------------
def _mlp_body(x_bf, w1_ref, b1_ref, w2_ref, b2_ref, out_dtype):
    h = jnp.dot(x_bf, w1_ref[...], preferred_element_type=jnp.float32) + b1_ref[...]
    h = jnp.maximum(h, 0.0).astype(jnp.bfloat16)
    o = jnp.dot(h, w2_ref[...], preferred_element_type=jnp.float32) + b2_ref[...]
    return o.astype(out_dtype)


def _fused_fwd_kernel(x_ref,
                      w1s_ref, b1s_ref, w2s_ref, b2s_ref,
                      w1t_ref, b1t_ref, w2t_ref, b2t_ref,
                      out_s_ref, out_t_ref):
    """Student forward + teacher forward sharing one VMEM-resident x tile."""
    x = x_ref[...].astype(jnp.bfloat16)
    out_s_ref[...] = _mlp_body(x, w1s_ref, b1s_ref, w2s_ref, b2s_ref, out_s_ref.dtype)
    out_t_ref[...] = _mlp_body(x, w1t_ref, b1t_ref, w2t_ref, b2t_ref, out_t_ref.dtype)


def _mlp_kernel(x_ref, w1_ref, b1_ref, w2_ref, b2_ref, o_ref):
    """Eval path: single Linear -> ReLU -> Linear (teacher only)."""
    x = x_ref[...].astype(jnp.bfloat16)
    o_ref[...] = _mlp_body(x, w1_ref, b1_ref, w2_ref, b2_ref, o_ref.dtype)


# ---------------------------------------------------------------------------
# Forward wrapper (mirrors TeacherStudentNetwork.forward)
# ---------------------------------------------------------------------------
def teacher_student_forward(x, net_params, mean_params, alpha,
                            training=True, block_b=256):
    w1, b1, w2, b2 = net_params
    mw1, mb1, mw2, mb2 = mean_params
    B, Din = x.shape
    H = w1.shape[1]
    Dout = w2.shape[1]
    tb = min(block_b, B)

    # Lane/sublane alignment (a real integration pads params once at init).
    assert B % tb == 0 and tb % 8 == 0, "batch tile must be a multiple of 8"
    assert Din % 128 == 0 and H % 128 == 0 and Dout % 128 == 0, \
        "feature dims must be 128-lane aligned"

    grid = (B // tb,)

    x_spec = pl.BlockSpec((tb, Din), lambda i: (i, 0))
    w1_spec = pl.BlockSpec((Din, H), lambda i: (0, 0))
    b1_spec = pl.BlockSpec((1, H), lambda i: (0, 0))
    w2_spec = pl.BlockSpec((H, Dout), lambda i: (0, 0))
    b2_spec = pl.BlockSpec((1, Dout), lambda i: (0, 0))
    out_spec = pl.BlockSpec((tb, Dout), lambda i: (i, 0))

    if not training:
        # Eval: only the teacher (mean_net) runs.  Cast weights to bf16 once
        # outside the grid (halves the weight DMA/VMEM footprint).
        return pl.pallas_call(
            _mlp_kernel,
            out_shape=jax.ShapeDtypeStruct((B, Dout), jnp.float32),
            grid=grid,
            in_specs=[x_spec, w1_spec, b1_spec, w2_spec, b2_spec],
            out_specs=out_spec,
            compiler_params=pltpu.CompilerParams(
                dimension_semantics=("parallel",)),
        )(x, mw1.astype(jnp.bfloat16), mb1, mw2.astype(jnp.bfloat16), mb2)

    # --- Step 1: EMA update, once per training step (no batch grid). ---------
    # Teacher f32 master params are updated "in place" via input_output_aliases
    # (inputs 4..7 donate their HBM buffers to outputs 0..3).
    (nmw1, nmb1, nmw2, nmb2,
     w1_bf, w2_bf, nmw1_bf, nmw2_bf) = pl.pallas_call(
        functools.partial(_ema_cast_kernel, float(alpha)),
        out_shape=(
            jax.ShapeDtypeStruct(mw1.shape, mw1.dtype),     # updated teacher (f32)
            jax.ShapeDtypeStruct(mb1.shape, mb1.dtype),
            jax.ShapeDtypeStruct(mw2.shape, mw2.dtype),
            jax.ShapeDtypeStruct(mb2.shape, mb2.dtype),
            jax.ShapeDtypeStruct(w1.shape, jnp.bfloat16),    # bf16 MXU copies
            jax.ShapeDtypeStruct(w2.shape, jnp.bfloat16),
            jax.ShapeDtypeStruct(mw1.shape, jnp.bfloat16),
            jax.ShapeDtypeStruct(mw2.shape, jnp.bfloat16),
        ),
        input_output_aliases={4: 0, 5: 1, 6: 2, 7: 3},
    )(w1, b1, w2, b2, mw1, mb1, mw2, mb2)

    # --- Step 2: student + teacher forwards, batch-parallel grid. ------------
    # Same order as PyTorch: _update_mean_net() before mean_net(x).
    results, results_m = pl.pallas_call(
        _fused_fwd_kernel,
        out_shape=(jax.ShapeDtypeStruct((B, Dout), jnp.float32),   # student
                   jax.ShapeDtypeStruct((B, Dout), jnp.float32)),  # teacher
        grid=grid,
        in_specs=[x_spec,
                  w1_spec, b1_spec, w2_spec, b2_spec,   # student (bf16 W, f32 b)
                  w1_spec, b1_spec, w2_spec, b2_spec],  # teacher (bf16 W, f32 b)
        out_specs=(out_spec, out_spec),
        compiler_params=pltpu.CompilerParams(
            # No revisited outputs here -> batch axis can shard across both
            # TensorCores on v7x.
            dimension_semantics=("parallel",)),
    )(x, w1_bf, b1, w2_bf, b2, nmw1_bf, nmb1, nmw2_bf, nmb2)

    return (results, results_m), (nmw1, nmb1, nmw2, nmb2)


# ---------------------------------------------------------------------------
# Main
# ---------------------------------------------------------------------------
if __name__ == "__main__":
    # Small but lane-aligned shapes (feature axes multiples of 128).
    B, D_IN, HID, D_OUT = 256, 128, 256, 128
    TB = 128                     # batch tile -> grid=(2,) exercises pipelining
    ALPHA = 0.999

    key = jax.random.PRNGKey(0)
    k_x, k_w1, k_b1, k_w2, k_b2 = jax.random.split(key, 5)

    x = jax.random.normal(k_x, (B, D_IN), dtype=jnp.float32)

    # Student parameters (nn.Linear-like scale).  Weights stored [D_in, D_out];
    # biases stored as (1, D) lane rows.
    w1 = jax.random.normal(k_w1, (D_IN, HID), dtype=jnp.float32) * (1.0 / jnp.sqrt(D_IN))
    b1 = jax.random.normal(k_b1, (1, HID), dtype=jnp.float32) * 0.01
    w2 = jax.random.normal(k_w2, (HID, D_OUT), dtype=jnp.float32) * (1.0 / jnp.sqrt(HID))
    b2 = jax.random.normal(k_b2, (1, D_OUT), dtype=jnp.float32) * 0.01
    net_params = (w1, b1, w2, b2)

    # mean_net starts as an exact copy of net (param_m.data.copy_(param.data)).
    # (Fresh copies: the training call donates/aliases the teacher buffers.)
    mean_params = tuple(jnp.array(p) for p in net_params)

    # ---- Training forward: (results, results_m) + in-place EMA-updated teacher.
    (results, results_m), new_mean_params = teacher_student_forward(
        x, net_params, mean_params, ALPHA, training=True, block_b=TB)
    jax.block_until_ready((results, results_m, new_mean_params))

    assert results.shape == (B, D_OUT)
    assert results_m.shape == (B, D_OUT)

    # Reference (f32, HIGHEST precision).  Kernel uses bf16 MXU operands with
    # f32 accumulation, so compare with bf16-level tolerances.
    def ref_mlp(xv, rw1, rb1, rw2, rb2):
        hh = jnp.maximum(
            jnp.dot(xv, rw1, precision=jax.lax.Precision.HIGHEST) + rb1, 0.0)
        return jnp.dot(hh, rw2, precision=jax.lax.Precision.HIGHEST) + rb2

    assert jnp.allclose(results, ref_mlp(x, *net_params), atol=1e-1, rtol=5e-2)
    # Teacher started as an exact copy -> EMA leaves it (numerically) equal.
    assert jnp.allclose(results, results_m, atol=1e-2, rtol=1e-2)
    for p_new, p_stu in zip(new_mean_params, net_params):
        assert jnp.allclose(p_new, p_stu, atol=1e-5, rtol=1e-5)

    # ---- Eval forward: only the (updated) teacher runs.
    eval_out = teacher_student_forward(
        x, net_params, new_mean_params, ALPHA, training=False, block_b=TB)
    jax.block_until_ready(eval_out)
    assert eval_out.shape == (B, D_OUT)
    assert jnp.allclose(eval_out, ref_mlp(x, *new_mean_params),
                        atol=1e-1, rtol=5e-2)

    # TODO(synk): initialize_centers() delegates to the wrapped backbone and
    # has no forward-pass Pallas equivalent for the synthesized MLP.
    print("KERNEL_OK")
</pallas_src>

<mosaic_0001>
module attributes {stable_mosaic.version = 11 : i64} {
  func.func @_ema_cast_kernel(%arg0: memref<128x256xf32, #tpu.memory_space<vmem>>, %arg1: memref<1x256xf32, #tpu.memory_space<vmem>>, %arg2: memref<256x128xf32, #tpu.memory_space<vmem>>, %arg3: memref<1x128xf32, #tpu.memory_space<vmem>>, %arg4: memref<128x256xf32, #tpu.memory_space<vmem>>, %arg5: memref<1x256xf32, #tpu.memory_space<vmem>>, %arg6: memref<256x128xf32, #tpu.memory_space<vmem>>, %arg7: memref<1x128xf32, #tpu.memory_space<vmem>>, %arg8: memref<128x256xf32, #tpu.memory_space<vmem>>, %arg9: memref<1x256xf32, #tpu.memory_space<vmem>>, %arg10: memref<256x128xf32, #tpu.memory_space<vmem>>, %arg11: memref<1x128xf32, #tpu.memory_space<vmem>>, %arg12: memref<128x256xbf16, #tpu.memory_space<vmem>>, %arg13: memref<256x128xbf16, #tpu.memory_space<vmem>>, %arg14: memref<128x256xbf16, #tpu.memory_space<vmem>>, %arg15: memref<256x128xbf16, #tpu.memory_space<vmem>>) attributes {dimension_semantics = [], scalar_prefetch = 0 : i64, scratch_operands = 0 : i64, tpu.core_type = #tpu.core_type<tc>} {
    %c0 = arith.constant 0 : index
    %c0_0 = arith.constant 0 : index
    %0 = vector.load %arg4[%c0, %c0_0] : memref<128x256xf32, #tpu.memory_space<vmem>>, vector<128x256xf32>
    %cst = arith.constant 9.990000e-01 : f32
    %1 = vector.broadcast %cst : f32 to vector<128x256xf32>
    %2 = arith.mulf %1, %0 : vector<128x256xf32>
    %c0_1 = arith.constant 0 : index
    %c0_2 = arith.constant 0 : index
    %3 = vector.load %arg0[%c0_1, %c0_2] : memref<128x256xf32, #tpu.memory_space<vmem>>, vector<128x256xf32>
    %cst_3 = arith.constant 1.000000e-03 : f32
    %4 = vector.broadcast %cst_3 : f32 to vector<128x256xf32>
    %5 = arith.mulf %4, %3 : vector<128x256xf32>
    %6 = arith.addf %2, %5 : vector<128x256xf32>
    %c0_4 = arith.constant 0 : index
    %c0_5 = arith.constant 0 : index
    %7 = vector.load %arg5[%c0_4, %c0_5] : memref<1x256xf32, #tpu.memory_space<vmem>>, vector<1x256xf32>
    %cst_6 = arith.constant 9.990000e-01 : f32
    %8 = vector.broadcast %cst_6 : f32 to vector<1x256xf32>
    %9 = arith.mulf %8, %7 : vector<1x256xf32>
    %c0_7 = arith.constant 0 : index
    %c0_8 = arith.constant 0 : index
    %10 = vector.load %arg1[%c0_7, %c0_8] : memref<1x256xf32, #tpu.memory_space<vmem>>, vector<1x256xf32>
    %cst_9 = arith.constant 1.000000e-03 : f32
    %11 = vector.broadcast %cst_9 : f32 to vector<1x256xf32>
    %12 = arith.mulf %11, %10 : vector<1x256xf32>
    %13 = arith.addf %9, %12 : vector<1x256xf32>
    %c0_10 = arith.constant 0 : index
    %c0_11 = arith.constant 0 : index
    %14 = vector.load %arg6[%c0_10, %c0_11] : memref<256x128xf32, #tpu.memory_space<vmem>>, vector<256x128xf32>
    %cst_12 = arith.constant 9.990000e-01 : f32
    %15 = vector.broadcast %cst_12 : f32 to vector<256x128xf32>
    %16 = arith.mulf %15, %14 : vector<256x128xf32>
    %c0_13 = arith.constant 0 : index
    %c0_14 = arith.constant 0 : index
    %17 = vector.load %arg2[%c0_13, %c0_14] : memref<256x128xf32, #tpu.memory_space<vmem>>, vector<256x128xf32>
    %cst_15 = arith.constant 1.000000e-03 : f32
    %18 = vector.broadcast %cst_15 : f32 to vector<256x128xf32>
    %19 = arith.mulf %18, %17 : vector<256x128xf32>
    %20 = arith.addf %16, %19 : vector<256x128xf32>
    %c0_16 = arith.constant 0 : index
    %c0_17 = arith.constant 0 : index
    %21 = vector.load %arg7[%c0_16, %c0_17] : memref<1x128xf32, #tpu.memory_space<vmem>>, vector<1x128xf32>
    %cst_18 = arith.constant 9.990000e-01 : f32
    %22 = vector.broadcast %cst_18 : f32 to vector<1x128xf32>
    %23 = arith.mulf %22, %21 : vector<1x128xf32>
    %c0_19 = arith.constant 0 : index
    %c0_20 = arith.constant 0 : index
    %24 = vector.load %arg3[%c0_19, %c0_20] : memref<1x128xf32, #tpu.memory_space<vmem>>, vector<1x128xf32>
    %cst_21 = arith.constant 1.000000e-03 : f32
    %25 = vector.broadcast %cst_21 : f32 to vector<1x128xf32>
    %26 = arith.mulf %25, %24 : vector<1x128xf32>
    %27 = arith.addf %23, %26 : vector<1x128xf32>
    %c0_22 = arith.constant 0 : index
    %c0_23 = arith.constant 0 : index
    %28 = vector.load %arg8[%c0_22, %c0_23] : memref<128x256xf32, #tpu.memory_space<vmem>>, vector<128x256xf32>
    tpu.vector_store %arg8[%c0_22, %c0_23], %6 {strides = array<i32>} : memref<128x256xf32, #tpu.memory_space<vmem>>, vector<128x256xf32>,
    %c0_24 = arith.constant 0 : index
    %c0_25 = arith.constant 0 : index
    %29 = vector.load %arg9[%c0_24, %c0_25] : memref<1x256xf32, #tpu.memory_space<vmem>>, vector<1x256xf32>
    tpu.vector_store %arg9[%c0_24, %c0_25], %13 {strides = array<i32>} : memref<1x256xf32, #tpu.memory_space<vmem>>, vector<1x256xf32>,
    %c0_26 = arith.constant 0 : index
    %c0_27 = arith.constant 0 : index
    %30 = vector.load %arg10[%c0_26, %c0_27] : memref<256x128xf32, #tpu.memory_space<vmem>>, vector<256x128xf32>
    tpu.vector_store %arg10[%c0_26, %c0_27], %20 {strides = array<i32>} : memref<256x128xf32, #tpu.memory_space<vmem>>, vector<256x128xf32>,
    %c0_28 = arith.constant 0 : index
    %c0_29 = arith.constant 0 : index
    %31 = vector.load %arg11[%c0_28, %c0_29] : memref<1x128xf32, #tpu.memory_space<vmem>>, vector<1x128xf32>
    tpu.vector_store %arg11[%c0_28, %c0_29], %27 {strides = array<i32>} : memref<1x128xf32, #tpu.memory_space<vmem>>, vector<1x128xf32>,
    %c0_30 = arith.constant 0 : index
    %c0_31 = arith.constant 0 : index
    %32 = vector.load %arg0[%c0_30, %c0_31] : memref<128x256xf32, #tpu.memory_space<vmem>>, vector<128x256xf32>
    %33 = arith.truncf %32 : vector<128x256xf32> to vector<128x256xbf16>
    %c0_32 = arith.constant 0 : index
    %c0_33 = arith.constant 0 : index
    %34 = vector.load %arg12[%c0_32, %c0_33] : memref<128x256xbf16, #tpu.memory_space<vmem>>, vector<128x256xbf16>
    tpu.vector_store %arg12[%c0_32, %c0_33], %33 {strides = array<i32>} : memref<128x256xbf16, #tpu.memory_space<vmem>>, vector<128x256xbf16>,
    %c0_34 = arith.constant 0 : index
    %c0_35 = arith.constant 0 : index
    %35 = vector.load %arg2[%c0_34, %c0_35] : memref<256x128xf32, #tpu.memory_space<vmem>>, vector<256x128xf32>
    %36 = arith.truncf %35 : vector<256x128xf32> to vector<256x128xbf16>
    %c0_36 = arith.constant 0 : index
    %c0_37 = arith.constant 0 : index
    %37 = vector.load %arg13[%c0_36, %c0_37] : memref<256x128xbf16, #tpu.memory_space<vmem>>, vector<256x128xbf16>
    tpu.vector_store %arg13[%c0_36, %c0_37], %36 {strides = array<i32>} : memref<256x128xbf16, #tpu.memory_space<vmem>>, vector<256x128xbf16>,
    %38 = arith.truncf %6 : vector<128x256xf32> to vector<128x256xbf16>
    %c0_38 = arith.constant 0 : index
    %c0_39 = arith.constant 0 : index
    %39 = vector.load %arg14[%c0_38, %c0_39] : memref<128x256xbf16, #tpu.memory_space<vmem>>, vector<128x256xbf16>
    tpu.vector_store %arg14[%c0_38, %c0_39], %38 {strides = array<i32>} : memref<128x256xbf16, #tpu.memory_space<vmem>>, vector<128x256xbf16>,
    %40 = arith.truncf %20 : vector<256x128xf32> to vector<256x128xbf16>
    %c0_40 = arith.constant 0 : index
    %c0_41 = arith.constant 0 : index
    %41 = vector.load %arg15[%c0_40, %c0_41] : memref<256x128xbf16, #tpu.memory_space<vmem>>, vector<256x128xbf16>
    tpu.vector_store %arg15[%c0_40, %c0_41], %40 {strides = array<i32>} : memref<256x128xbf16, #tpu.memory_space<vmem>>, vector<256x128xbf16>,
    return
  }
}

</mosaic_0001>

<llo_original>
// kernel: tpu_custom_call.1
$region0: #{tpu_custom_call.1}
  #allocation0 [shape = 'u32[]', space=smem, size = 0x4, offset = 0x4, fixed_abs, tag = 'smem constant byte address 0x4 - core index']
  #allocation1 [shape = 'u32[144,128]{1,0:T(1,128)}', space=vmem, size = 0x12000, scoped, tag = 'internal scratch']
  %s0 = inlined_call_operand.vmem [shape: f32[128,256], index: 0, kind: input, shape index: {}]
  %s1 = inlined_call_operand.vmem [shape: f32[1,256], index: 1, kind: input, shape index: {}]
  %s2 = inlined_call_operand.vmem [shape: f32[256,128], index: 2, kind: input, shape index: {}]
  %s3 = inlined_call_operand.vmem [shape: f32[1,128], index: 3, kind: input, shape index: {}]
  %s4 = inlined_call_operand.hbm [shape: f32[128,256], index: 4, kind: input, shape index: {}, may-alias: {4,8}]
  %s5 = inlined_call_operand.hbm [shape: f32[1,256], index: 5, kind: input, shape index: {}, may-alias: {5,9}]
  %s6 = inlined_call_operand.hbm [shape: f32[256,128], index: 6, kind: input, shape index: {}, may-alias: {6,10}]
  %s7 = inlined_call_operand.hbm [shape: f32[1,128], index: 7, kind: input, shape index: {}, may-alias: {7,11}]
  %s8 = inlined_call_operand.hbm [shape: f32[128,256], index: 8, kind: output, shape index: {0}, may-alias: {4,8}]
  %s9 = inlined_call_operand.hbm [shape: f32[1,256], index: 9, kind: output, shape index: {1}, may-alias: {5,9}]
  %s10 = inlined_call_operand.hbm [shape: f32[256,128], index: 10, kind: output, shape index: {2}, may-alias: {6,10}]
  %s11 = inlined_call_operand.hbm [shape: f32[1,128], index: 11, kind: output, shape index: {3}, may-alias: {7,11}]
  %s12 = inlined_call_operand.hbm [shape: bf16[128,256], index: 12, kind: output, shape index: {4}]
  %s13 = inlined_call_operand.hbm [shape: bf16[256,128], index: 13, kind: output, shape index: {5}]
  %s14 = inlined_call_operand.hbm [shape: bf16[128,256], index: 14, kind: output, shape index: {6}]
  %s15 = inlined_call_operand.hbm [shape: bf16[256,128], index: 15, kind: output, shape index: {7}]
  %16 = xla_tuple %s8, %s9, %s10, %s11, %s12, %s13, %s14, %s15
  %s17 = sld [smem:[#allocation0]]
  $region114: #{tpu_custom_call.1} parent=0
    _
  %s19 = ssub.s32 1, %s17
  %s20 = scalar_select 0, %s19, %s17
  $region1: #{tpu_custom_call.1} parent=0
    #allocation2 [shape = 'u8[131072]{0}', space=vmem, size = 0x20000, scoped, tag = 'input window, operand 4, single buffered']
    #allocation3 [shape = 's32[1]{0}', space=sflag, size = 0x4, scoped, tag = 'scoped memory for tpu_custom_call.1']
    #allocation4 [shape = 's32[1]{0}', space=sflag, size = 0x4, scoped, tag = 'scoped memory for tpu_custom_call.1']
    #allocation5 [shape = 'u8[1024]{0}', space=vmem, size = 0x400, scoped, tag = 'input window, operand 5, single buffered']
    #allocation6 [shape = 's32[1]{0}', space=sflag, size = 0x4, scoped, tag = 'scoped memory for tpu_custom_call.1']
    #allocation7 [shape = 'u8[131072]{0}', space=vmem, size = 0x20000, scoped, tag = 'input window, operand 6, single buffered']
    #allocation8 [shape = 'u8[512]{0}', space=vmem, size = 0x400, scoped, tag = 'input window, operand 7, single buffered']
    #allocation9 [shape = 's32[1]{0}', space=sflag, size = 0x4, scoped, tag = 'scoped memory for tpu_custom_call.1']
    #allocation10 [shape = 'u8[131072]{0}', space=vmem, size = 0x20000, scoped, tag = 'output window, operand 0, single buffered']
    #allocation11 [shape = 'u8[1024]{0}', space=vmem, size = 0x400, scoped, tag = 'output window, operand 1, single buffered']
    #allocation12 [shape = 's32[1]{0}', space=sflag, size = 0x4, scoped, tag = 'scoped memory for tpu_custom_call.1']
    #allocation13 [shape = 'u8[131072]{0}', space=vmem, size = 0x20000, scoped, tag = 'output window, operand 2, single buffered']
    #allocation14 [shape = 'u8[512]{0}', space=vmem, size = 0x400, scoped, tag = 'output window, operand 3, single buffered']
    #allocation15 [shape = 's32[1]{0}', space=sflag, size = 0x4, scoped, tag = 'scoped memory for tpu_custom_call.1']
    #allocation16 [shape = 'u8[65536]{0}', space=vmem, size = 0x10000, scoped, tag = 'output window, operand 4, single buffered']
    #allocation17 [shape = 'u8[65536]{0}', space=vmem, size = 0x10000, scoped, tag = 'output window, operand 5, single buffered']
    #allocation18 [shape = 's32[1]{0}', space=sflag, size = 0x4, scoped, tag = 'scoped memory for tpu_custom_call.1']
    #allocation19 [shape = 'u8[65536]{0}', space=vmem, size = 0x10000, scoped, tag = 'output window, operand 6, single buffered']
    #allocation20 [shape = 'u8[65536]{0}', space=vmem, size = 0x10000, scoped, tag = 'output window, operand 7, single buffered']
    #allocation21 [shape = 's32[1]{0}', space=sflag, size = 0x4, scoped, tag = 'scoped memory for tpu_custom_call.1']
    %21 = vsyncpa [#allocation3], 0
    %22 = vsyncpa [#allocation6], 0
    %23 = vsyncpa [#allocation9], 0
    %24 = vsyncpa [#allocation4], 0
    %25 = vsyncpa [#allocation12], 0
    %26 = vsyncpa [#allocation15], 0
    %27 = vsyncpa [#allocation18], 0
    %28 = vsyncpa [#allocation21], 0
    // Predicated region
    $region2: #{tpu_custom_call.1} parent=1 // pred_check
      _
    $region3: #{tpu_custom_call.1} parent=1 // pred_check_branch
      %30 = sbr.rel (0) target = $region5
    $region4: #{tpu_custom_call.1} parent=1 // pred_region
      _
    $region5: #{tpu_custom_call.1} parent=1 // pred_fallthru
      _
    // Predicated region
    $region6: #{tpu_custom_call.1} parent=1 // pred_check
      _
    $region7: #{tpu_custom_call.1} parent=1 // pred_check_branch
      %32 = sbr.rel (0) target = $region9
    $region8: #{tpu_custom_call.1} parent=1 // pred_region
      _
    $region9: #{tpu_custom_call.1} parent=1 // pred_fallthru
      _
    // Predicated region
    $region10: #{tpu_custom_call.1} parent=1 // pred_check
      _
    $region11: #{tpu_custom_call.1} parent=1 // pred_check_branch
      %34 = sbr.rel (0) target = $region13
    $region12: #{tpu_custom_call.1} parent=1 // pred_region
      _
    $region13: #{tpu_custom_call.1} parent=1 // pred_fallthru
      _
    // Predicated region
    $region14: #{tpu_custom_call.1} parent=1 // pred_check
      _
    $region15: #{tpu_custom_call.1} parent=1 // pred_check_branch
      %36 = sbr.rel (0) target = $region17
    $region16: #{tpu_custom_call.1} parent=1 // pred_region
      _
    $region17: #{tpu_custom_call.1} parent=1 // pred_fallthru
      _
    // Predicated region
    $region18: #{tpu_custom_call.1} parent=1 // pred_check
      _
    $region19: #{tpu_custom_call.1} parent=1 // pred_check_branch
      %38 = sbr.rel (0) target = $region21
    $region20: #{tpu_custom_call.1} parent=1 // pred_region
      %s40 = ssub.s32 4096, 4096
      %41 = vsyncadd [#allocation3], %s40
      %s42 = sshll.u32 [#allocation2], 4
      %s43 = int_to_ptr.vmem [resolvable:$true] %s42
      %48 = dma.hbm_to_vmem [thread:$0]  %s4, 4096, %s43, [#allocation3], 256, 256, 16
    $region21: #{tpu_custom_call.1} parent=1 // pred_fallthru
      _
    // Predicated region
    $region22: #{tpu_custom_call.1} parent=1 // pred_check
      _
    $region23: #{tpu_custom_call.1} parent=1 // pred_check_branch
      %50 = sbr.rel (0) target = $region25
    $region24: #{tpu_custom_call.1} parent=1 // pred_region
      %s52 = ssub.s32 32, 32
      %53 = vsyncadd [#allocation6], %s52
      %s55 = sshll.u32 [#allocation5], 4
      %s56 = int_to_ptr.vmem [resolvable:$true] %s55
      %58 = dma.hbm_to_vmem [thread:$0]  %s5, 32, %s56, [#allocation6]
    $region25: #{tpu_custom_call.1} parent=1 // pred_fallthru
      _
    // Predicated region
    $region26: #{tpu_custom_call.1} parent=1 // pred_check
      _
    $region27: #{tpu_custom_call.1} parent=1 // pred_check_branch
      %60 = sbr.rel (0) target = $region29
    $region28: #{tpu_custom_call.1} parent=1 // pred_region
      %s62 = ssub.s32 4096, 4096
      %63 = vsyncadd [#allocation6], %s62
      %s64 = sshll.u32 [#allocation7], 4
      %s65 = int_to_ptr.vmem [resolvable:$true] %s64
      %70 = dma.hbm_to_vmem [thread:$0]  %s6, 4096, %s65, [#allocation6], 128, 128, 8
    $region29: #{tpu_custom_call.1} parent=1 // pred_fallthru
      _
    // Predicated region
    $region30: #{tpu_custom_call.1} parent=1 // pred_check
      _
    $region31: #{tpu_custom_call.1} parent=1 // pred_check_branch
      %72 = sbr.rel (0) target = $region33
    $region32: #{tpu_custom_call.1} parent=1 // pred_region
      %s74 = ssub.s32 16, 16
      %75 = vsyncadd [#allocation9], %s74
      %s77 = sshll.u32 [#allocation8], 4
      %s78 = int_to_ptr.vmem [resolvable:$true] %s77
      %80 = dma.hbm_to_vmem [thread:$0]  %s7, 16, %s78, [#allocation9]
    $region33: #{tpu_custom_call.1} parent=1 // pred_fallthru
      _
    // Predicated region
    $region34: #{tpu_custom_call.1} parent=1 // pred_check
      _
    $region35: #{tpu_custom_call.1} parent=1 // pred_check_branch
      %82 = sbr.rel (0) target = $region37
    $region36: #{tpu_custom_call.1} parent=1 // pred_region
      %83 = dma.done [#allocation3], 4096
    $region37: #{tpu_custom_call.1} parent=1 // pred_fallthru
      _
    // Predicated region
    $region38: #{tpu_custom_call.1} parent=1 // pred_check
      _
    $region39: #{tpu_custom_call.1} parent=1 // pred_check_branch
      %85 = sbr.rel (0) target = $region41
    $region40: #{tpu_custom_call.1} parent=1 // pred_region
      %86 = dma.done [#allocation6], 32
    $region41: #{tpu_custom_call.1} parent=1 // pred_fallthru
      _
    // Predicated region
    $region42: #{tpu_custom_call.1} parent=1 // pred_check
      _
    $region43: #{tpu_custom_call.1} parent=1 // pred_check_branch
      %88 = sbr.rel (0) target = $region45
    $region44: #{tpu_custom_call.1} parent=1 // pred_region
      %89 = dma.done [#allocation6], 4096
    $region45: #{tpu_custom_call.1} parent=1 // pred_fallthru
      _
    // Predicated region
    $region46: #{tpu_custom_call.1} parent=1 // pred_check
      _
    $region47: #{tpu_custom_call.1} parent=1 // pred_check_branch
      %91 = sbr.rel (0) target = $region49
    $region48: #{tpu_custom_call.1} parent=1 // pred_region
      %92 = dma.done [#allocation9], 16
    $region49: #{tpu_custom_call.1} parent=1 // pred_fallthru
      _
    %v93 = vld [vmem:[#allocation2] sm:$0xff]
    %v94 = vld [vmem:[#allocation2 + $0x8] sm:$0xff]
    %v95 = vld [vmem:[#allocation2 + $0x10] sm:$0xff]
    %v96 = vld [vmem:[#allocation2 + $0x18] sm:$0xff]
    %v97 = vld [vmem:[#allocation2 + $0x20] sm:$0xff]
    %v98 = vld [vmem:[#allocation2 + $0x28] sm:$0xff]
    %v99 = vld [vmem:[#allocation2 + $0x30] sm:$0xff]
    %v100 = vld [vmem:[#allocation2 + $0x38] sm:$0xff]
    %v101 = vld [vmem:[#allocation2 + $0x40] sm:$0xff]
    %v102 = vld [vmem:[#allocation2 + $0x48] sm:$0xff]
    %v103 = vld [vmem:[#allocation2 + $0x50] sm:$0xff]
    %v104 = vld [vmem:[#allocation2 + $0x58] sm:$0xff]
    %v105 = vld [vmem:[#allocation2 + $0x60] sm:$0xff]
    %v106 = vld [vmem:[#allocation2 + $0x68] sm:$0xff]
    %v107 = vld [vmem:[#allocation2 + $0x70] sm:$0xff]
    %v108 = vld [vmem:[#allocation2 + $0x78] sm:$0xff]
    %v109 = vld [vmem:[#allocation2 + $0x80] sm:$0xff]
    %v110 = vld [vmem:[#allocation2 + $0x88] sm:$0xff]
    %v111 = vld [vmem:[#allocation2 + $0x90] sm:$0xff]
    %v112 = vld [vmem:[#allocation2 + $0x98] sm:$0xff]
    %v113 = vld [vmem:[#allocation2 + $0xa0] sm:$0xff]
    %v114 = vld [vmem:[#allocation2 + $0xa8] sm:$0xff]
    %v115 = vld [vmem:[#allocation2 + $0xb0] sm:$0xff]
    %v116 = vld [vmem:[#allocation2 + $0xb8] sm:$0xff]
    %v117 = vld [vmem:[#allocation2 + $0xc0] sm:$0xff]
    %v118 = vld [vmem:[#allocation2 + $0xc8] sm:$0xff]
    %v119 = vld [vmem:[#allocation2 + $0xd0] sm:$0xff]
    %v120 = vld [vmem:[#allocation2 + $0xd8] sm:$0xff]
    %v121 = vld [vmem:[#allocation2 + $0xe0] sm:$0xff]
    %v122 = vld [vmem:[#allocation2 + $0xe8] sm:$0xff]
    %v123 = vld [vmem:[#allocation2 + $0xf0] sm:$0xff]
    %v124 = vld [vmem:[#allocation2 + $0xf8] sm:$0xff]
    %v125 = vmul.f32 %v93, 0.999
    %v126 = vmul.f32 %v94, 0.999
    %v127 = vmul.f32 %v95, 0.999
    %v128 = vmul.f32 %v96, 0.999
    %v129 = vmul.f32 %v97, 0.999
    %v130 = vmul.f32 %v98, 0.999
    %v131 = vmul.f32 %v99, 0.999
    %v132 = vmul.f32 %v100, 0.999
    %v133 = vmul.f32 %v101, 0.999
    %v134 = vmul.f32 %v102, 0.999
    %v135 = vmul.f32 %v103, 0.999
    %v136 = vmul.f32 %v104, 0.999
    %v137 = vmul.f32 %v105, 0.999
    %v138 = vmul.f32 %v106, 0.999
    %v139 = vmul.f32 %v107, 0.999
    %v140 = vmul.f32 %v108, 0.999
    %v141 = vmul.f32 %v109, 0.999
    %v142 = vmul.f32 %v110, 0.999
    %v143 = vmul.f32 %v111, 0.999
    %v144 = vmul.f32 %v112, 0.999
    %v145 = vmul.f32 %v113, 0.999
    %v146 = vmul.f32 %v114, 0.999
    %v147 = vmul.f32 %v115, 0.999
    %v148 = vmul.f32 %v116, 0.999
    %v149 = vmul.f32 %v117, 0.999
    %v150 = vmul.f32 %v118, 0.999
    %v151 = vmul.f32 %v119, 0.999
    %v152 = vmul.f32 %v120, 0.999
    %v153 = vmul.f32 %v121, 0.999
    %v154 = vmul.f32 %v122, 0.999
    %v155 = vmul.f32 %v123, 0.999
    %v156 = vmul.f32 %v124, 0.999
    %v157 = vld [vmem:[%s0] sm:$0xff]
    %v158 = vld [vmem:[%s0 + $0x8] sm:$0xff]
    %v159 = vld [vmem:[%s0 + $0x10] sm:$0xff]
    %v160 = vld [vmem:[%s0 + $0x18] sm:$0xff]
    %v161 = vld [vmem:[%s0 + $0x20] sm:$0xff]
    %v162 = vld [vmem:[%s0 + $0x28] sm:$0xff]
    %v163 = vld [vmem:[%s0 + $0x30] sm:$0xff]
    %v164 = vld [vmem:[%s0 + $0x38] sm:$0xff]
    %v165 = vld [vmem:[%s0 + $0x40] sm:$0xff]
    %v166 = vld [vmem:[%s0 + $0x48] sm:$0xff]
    %v167 = vld [vmem:[%s0 + $0x50] sm:$0xff]
    %v168 = vld [vmem:[%s0 + $0x58] sm:$0xff]
    %v169 = vld [vmem:[%s0 + $0x60] sm:$0xff]
    %v170 = vld [vmem:[%s0 + $0x68] sm:$0xff]
    %v171 = vld [vmem:[%s0 + $0x70] sm:$0xff]
    %v172 = vld [vmem:[%s0 + $0x78] sm:$0xff]
    %v173 = vld [vmem:[%s0 + $0x80] sm:$0xff]
    %v174 = vld [vmem:[%s0 + $0x88] sm:$0xff]
    %v175 = vld [vmem:[%s0 + $0x90] sm:$0xff]
    %v176 = vld [vmem:[%s0 + $0x98] sm:$0xff]
    %v177 = vld [vmem:[%s0 + $0xa0] sm:$0xff]
    %v178 = vld [vmem:[%s0 + $0xa8] sm:$0xff]
    %v179 = vld [vmem:[%s0 + $0xb0] sm:$0xff]
    %v180 = vld [vmem:[%s0 + $0xb8] sm:$0xff]
    %v181 = vld [vmem:[%s0 + $0xc0] sm:$0xff]
    %v182 = vld [vmem:[%s0 + $0xc8] sm:$0xff]
    %v183 = vld [vmem:[%s0 + $0xd0] sm:$0xff]
    %v184 = vld [vmem:[%s0 + $0xd8] sm:$0xff]
    %v185 = vld [vmem:[%s0 + $0xe0] sm:$0xff]
    %v186 = vld [vmem:[%s0 + $0xe8] sm:$0xff]
    %v187 = vld [vmem:[%s0 + $0xf0] sm:$0xff]
    %v188 = vld [vmem:[%s0 + $0xf8] sm:$0xff]
    %v189 = vmul.f32 %v157, 0.001
    %v190 = vmul.f32 %v158, 0.001
    %v191 = vmul.f32 %v159, 0.001
    %v192 = vmul.f32 %v160, 0.001
    %v193 = vmul.f32 %v161, 0.001
    %v194 = vmul.f32 %v162, 0.001
    %v195 = vmul.f32 %v163, 0.001
    %v196 = vmul.f32 %v164, 0.001
    %v197 = vmul.f32 %v165, 0.001
    %v198 = vmul.f32 %v166, 0.001
    %v199 = vmul.f32 %v167, 0.001
    %v200 = vmul.f32 %v168, 0.001
    %v201 = vmul.f32 %v169, 0.001
    %v202 = vmul.f32 %v170, 0.001
    %v203 = vmul.f32 %v171, 0.001
    %v204 = vmul.f32 %v172, 0.001
    %v205 = vmul.f32 %v173, 0.001
    %v206 = vmul.f32 %v174, 0.001
    %v207 = vmul.f32 %v175, 0.001
    %v208 = vmul.f32 %v176, 0.001
    %v209 = vmul.f32 %v177, 0.001
    %v210 = vmul.f32 %v178, 0.001
    %v211 = vmul.f32 %v179, 0.001
    %v212 = vmul.f32 %v180, 0.001
    %v213 = vmul.f32 %v181, 0.001
    %v214 = vmul.f32 %v182, 0.001
    %v215 = vmul.f32 %v183, 0.001
    %v216 = vmul.f32 %v184, 0.001
    %v217 = vmul.f32 %v185, 0.001
    %v218 = vmul.f32 %v186, 0.001
    %v219 = vmul.f32 %v187, 0.001
    %v220 = vmul.f32 %v188, 0.001
    %v221 = vadd.f32 %v125, %v189
    %v222 = vadd.f32 %v126, %v190
    %v223 = vadd.f32 %v127, %v191
    %v224 = vadd.f32 %v128, %v192
    %v225 = vadd.f32 %v129, %v193
    %v226 = vadd.f32 %v130, %v194
    %v227 = vadd.f32 %v131, %v195
    %v228 = vadd.f32 %v132, %v196
    %v229 = vadd.f32 %v133, %v197
    %v230 = vadd.f32 %v134, %v198
    %v231 = vadd.f32 %v135, %v199
    %v232 = vadd.f32 %v136, %v200
    %v233 = vadd.f32 %v137, %v201
    %v234 = vadd.f32 %v138, %v202
    %v235 = vadd.f32 %v139, %v203
    %v236 = vadd.f32 %v140, %v204
    %v237 = vadd.f32 %v141, %v205
    %v238 = vadd.f32 %v142, %v206
    %v239 = vadd.f32 %v143, %v207
    %v240 = vadd.f32 %v144, %v208
    %v241 = vadd.f32 %v145, %v209
    %v242 = vadd.f32 %v146, %v210
    %v243 = vadd.f32 %v147, %v211
    %v244 = vadd.f32 %v148, %v212
    %v245 = vadd.f32 %v149, %v213
    %v246 = vadd.f32 %v150, %v214
    %v247 = vadd.f32 %v151, %v215
    %v248 = vadd.f32 %v152, %v216
    %v249 = vadd.f32 %v153, %v217
    %v250 = vadd.f32 %v154, %v218
    %v251 = vadd.f32 %v155, %v219
    %v252 = vadd.f32 %v156, %v220
    %v253 = vld [vmem:[#allocation5] sm:$0x3]
    %v254 = vmul.f32 %v253, 0.999
    %v255 = vld [vmem:[%s1] sm:$0x3]
    %v256 = vmul.f32 %v255, 0.001
    %v257 = vadd.f32 %v254, %v256
    %v258 = vld [vmem:[#allocation7] sm:$0xff]
    %v259 = vld [vmem:[#allocation7 + $0x8] sm:$0xff]
    %v260 = vld [vmem:[#allocation7 + $0x10] sm:$0xff]
    %v261 = vld [vmem:[#allocation7 + $0x18] sm:$0xff]
    %v262 = vld [vmem:[#allocation7 + $0x20] sm:$0xff]
    %v263 = vld [vmem:[#allocation7 + $0x28] sm:$0xff]
    %v264 = vld [vmem:[#allocation7 + $0x30] sm:$0xff]
    %v265 = vld [vmem:[#allocation7 + $0x38] sm:$0xff]
    %v266 = vld [vmem:[#allocation7 + $0x40] sm:$0xff]
    %v267 = vld [vmem:[#allocation7 + $0x48] sm:$0xff]
    %v268 = vld [vmem:[#allocation7 + $0x50] sm:$0xff]
    %v269 = vld [vmem:[#allocation7 + $0x58] sm:$0xff]
    %v270 = vld [vmem:[#allocation7 + $0x60] sm:$0xff]
    %v271 = vld [vmem:[#allocation7 + $0x68] sm:$0xff]
    %v272 = vld [vmem:[#allocation7 + $0x70] sm:$0xff]
    %v273 = vld [vmem:[#allocation7 + $0x78] sm:$0xff]
    %v274 = vld [vmem:[#allocation7 + $0x80] sm:$0xff]
    %v275 = vld [vmem:[#allocation7 + $0x88] sm:$0xff]
    %v276 = vld [vmem:[#allocation7 + $0x90] sm:$0xff]
    %v277 = vld [vmem:[#allocation7 + $0x98] sm:$0xff]
    %v278 = vld [vmem:[#allocation7 + $0xa0] sm:$0xff]
    %v279 = vld [vmem:[#allocation7 + $0xa8] sm:$0xff]
    %v280 = vld [vmem:[#allocation7 + $0xb0] sm:$0xff]
    %v281 = vld [vmem:[#allocation7 + $0xb8] sm:$0xff]
    %v282 = vld [vmem:[#allocation7 + $0xc0] sm:$0xff]
    %v283 = vld [vmem:[#allocation7 + $0xc8] sm:$0xff]
    %v284 = vld [vmem:[#allocation7 + $0xd0] sm:$0xff]
    %v285 = vld [vmem:[#allocation7 + $0xd8] sm:$0xff]
    %v286 = vld [vmem:[#allocation7 + $0xe0] sm:$0xff]
    %v287 = vld [vmem:[#allocation7 + $0xe8] sm:$0xff]
    %v288 = vld [vmem:[#allocation7 + $0xf0] sm:$0xff]
    %v289 = vld [vmem:[#allocation7 + $0xf8] sm:$0xff]
    %v290 = vmul.f32 %v258, 0.999
    %v291 = vmul.f32 %v259, 0.999
    %v292 = vmul.f32 %v260, 0.999
    %v293 = vmul.f32 %v261, 0.999
    %v294 = vmul.f32 %v262, 0.999
    %v295 = vmul.f32 %v263, 0.999
    %v296 = vmul.f32 %v264, 0.999
    %v297 = vmul.f32 %v265, 0.999
    %v298 = vmul.f32 %v266, 0.999
    %v299 = vmul.f32 %v267, 0.999
    %v300 = vmul.f32 %v268, 0.999
    %v301 = vmul.f32 %v269, 0.999
    %v302 = vmul.f32 %v270, 0.999
    %v303 = vmul.f32 %v271, 0.999
    %v304 = vmul.f32 %v272, 0.999
    %v305 = vmul.f32 %v273, 0.999
    %v306 = vmul.f32 %v274, 0.999
    %v307 = vmul.f32 %v275, 0.999
    %v308 = vmul.f32 %v276, 0.999
    %v309 = vmul.f32 %v277, 0.999
    %v310 = vmul.f32 %v278, 0.999
    %v311 = vmul.f32 %v279, 0.999
    %v312 = vmul.f32 %v280, 0.999
    %v313 = vmul.f32 %v281, 0.999
    %v314 = vmul.f32 %v282, 0.999
    %v315 = vmul.f32 %v283, 0.999
    %v316 = vmul.f32 %v284, 0.999
    %v317 = vmul.f32 %v285, 0.999
    %v318 = vmul.f32 %v286, 0.999
    %v319 = vmul.f32 %v287, 0.999
    %v320 = vmul.f32 %v288, 0.999
    %v321 = vmul.f32 %v289, 0.999
    %v322 = vld [vmem:[%s2] sm:$0xff]
    %v323 = vld [vmem:[%s2 + $0x8] sm:$0xff]
    %v324 = vld [vmem:[%s2 + $0x10] sm:$0xff]
    %v325 = vld [vmem:[%s2 + $0x18] sm:$0xff]
    %v326 = vld [vmem:[%s2 + $0x20] sm:$0xff]
    %v327 = vld [vmem:[%s2 + $0x28] sm:$0xff]
    %v328 = vld [vmem:[%s2 + $0x30] sm:$0xff]
    %v329 = vld [vmem:[%s2 + $0x38] sm:$0xff]
    %v330 = vld [vmem:[%s2 + $0x40] sm:$0xff]
    %v331 = vld [vmem:[%s2 + $0x48] sm:$0xff]
    %v332 = vld [vmem:[%s2 + $0x50] sm:$0xff]
    %v333 = vld [vmem:[%s2 + $0x58] sm:$0xff]
    %v334 = vld [vmem:[%s2 + $0x60] sm:$0xff]
    %v335 = vld [vmem:[%s2 + $0x68] sm:$0xff]
    %v336 = vld [vmem:[%s2 + $0x70] sm:$0xff]
    %v337 = vld [vmem:[%s2 + $0x78] sm:$0xff]
    %v338 = vld [vmem:[%s2 + $0x80] sm:$0xff]
    %v339 = vld [vmem:[%s2 + $0x88] sm:$0xff]
    %v340 = vld [vmem:[%s2 + $0x90] sm:$0xff]
    %v341 = vld [vmem:[%s2 + $0x98] sm:$0xff]
    %v342 = vld [vmem:[%s2 + $0xa0] sm:$0xff]
    %v343 = vld [vmem:[%s2 + $0xa8] sm:$0xff]
    %v344 = vld [vmem:[%s2 + $0xb0] sm:$0xff]
    %v345 = vld [vmem:[%s2 + $0xb8] sm:$0xff]
    %v346 = vld [vmem:[%s2 + $0xc0] sm:$0xff]
    %v347 = vld [vmem:[%s2 + $0xc8] sm:$0xff]
    %v348 = vld [vmem:[%s2 + $0xd0] sm:$0xff]
    %v349 = vld [vmem:[%s2 + $0xd8] sm:$0xff]
    %v350 = vld [vmem:[%s2 + $0xe0] sm:$0xff]
    %v351 = vld [vmem:[%s2 + $0xe8] sm:$0xff]
    %v352 = vld [vmem:[%s2 + $0xf0] sm:$0xff]
    %v353 = vld [vmem:[%s2 + $0xf8] sm:$0xff]
    %v354 = vmul.f32 %v322, 0.001
    %v355 = vmul.f32 %v323, 0.001
    %v356 = vmul.f32 %v324, 0.001
    %v357 = vmul.f32 %v325, 0.001
    %v358 = vmul.f32 %v326, 0.001
    %v359 = vmul.f32 %v327, 0.001
    %v360 = vmul.f32 %v328, 0.001
    %v361 = vmul.f32 %v329, 0.001
    %v362 = vmul.f32 %v330, 0.001
    %v363 = vmul.f32 %v331, 0.001
    %v364 = vmul.f32 %v332, 0.001
    %v365 = vmul.f32 %v333, 0.001
    %v366 = vmul.f32 %v334, 0.001
    %v367 = vmul.f32 %v335, 0.001
    %v368 = vmul.f32 %v336, 0.001
    %v369 = vmul.f32 %v337, 0.001
    %v370 = vmul.f32 %v338, 0.001
    %v371 = vmul.f32 %v339, 0.001
    %v372 = vmul.f32 %v340, 0.001
    %v373 = vmul.f32 %v341, 0.001
    %v374 = vmul.f32 %v342, 0.001
    %v375 = vmul.f32 %v343, 0.001
    %v376 = vmul.f32 %v344, 0.001
    %v377 = vmul.f32 %v345, 0.001
    %v378 = vmul.f32 %v346, 0.001
    %v379 = vmul.f32 %v347, 0.001
    %v380 = vmul.f32 %v348, 0.001
    %v381 = vmul.f32 %v349, 0.001
    %v382 = vmul.f32 %v350, 0.001
    %v383 = vmul.f32 %v351, 0.001
    %v384 = vmul.f32 %v352, 0.001
    %v385 = vmul.f32 %v353, 0.001
    %v386 = vadd.f32 %v290, %v354
    %v387 = vadd.f32 %v291, %v355
    %v388 = vadd.f32 %v292, %v356
    %v389 = vadd.f32 %v293, %v357
    %v390 = vadd.f32 %v294, %v358
    %v391 = vadd.f32 %v295, %v359
    %v392 = vadd.f32 %v296, %v360
    %v393 = vadd.f32 %v297, %v361
    %v394 = vadd.f32 %v298, %v362
    %v395 = vadd.f32 %v299, %v363
    %v396 = vadd.f32 %v300, %v364
    %v397 = vadd.f32 %v301, %v365
    %v398 = vadd.f32 %v302, %v366
    %v399 = vadd.f32 %v303, %v367
    %v400 = vadd.f32 %v304, %v368
    %v401 = vadd.f32 %v305, %v369
    %v402 = vadd.f32 %v306, %v370
    %v403 = vadd.f32 %v307, %v371
    %v404 = vadd.f32 %v308, %v372
    %v405 = vadd.f32 %v309, %v373
    %v406 = vadd.f32 %v310, %v374
    %v407 = vadd.f32 %v311, %v375
    %v408 = vadd.f32 %v312, %v376
    %v409 = vadd.f32 %v313, %v377
    %v410 = vadd.f32 %v314, %v378
    %v411 = vadd.f32 %v315, %v379
    %v412 = vadd.f32 %v316, %v380
    %v413 = vadd.f32 %v317, %v381
    %v414 = vadd.f32 %v318, %v382
    %v415 = vadd.f32 %v319, %v383
    %v416 = vadd.f32 %v320, %v384
    %v417 = vadd.f32 %v321, %v385
    %v418 = vld [vmem:[#allocation8] sm:$0x1]
    %v419 = vmul.f32 %v418, 0.999
    %v420 = vld [vmem:[%s3] sm:$0x1]
    %v421 = vmul.f32 %v420, 0.001
    %v422 = vadd.f32 %v419, %v421
    %423 = vst [vmem:[#allocation10] sm:$0xff] %v221
    %424 = vst [vmem:[#allocation10 + $0x8] sm:$0xff] %v222
    %425 = vst [vmem:[#allocation10 + $0x10] sm:$0xff] %v223
    %426 = vst [vmem:[#allocation10 + $0x18] sm:$0xff] %v224
    %427 = vst [vmem:[#allocation10 + $0x20] sm:$0xff] %v225
    %428 = vst [vmem:[#allocation10 + $0x28] sm:$0xff] %v226
    %429 = vst [vmem:[#allocation10 + $0x30] sm:$0xff] %v227
    %430 = vst [vmem:[#allocation10 + $0x38] sm:$0xff] %v228
    %431 = vst [vmem:[#allocation10 + $0x40] sm:$0xff] %v229
    %432 = vst [vmem:[#allocation10 + $0x48] sm:$0xff] %v230
    %433 = vst [vmem:[#allocation10 + $0x50] sm:$0xff] %v231
    %434 = vst [vmem:[#allocation10 + $0x58] sm:$0xff] %v232
    %435 = vst [vmem:[#allocation10 + $0x60] sm:$0xff] %v233
    %436 = vst [vmem:[#allocation10 + $0x68] sm:$0xff] %v234
    %437 = vst [vmem:[#allocation10 + $0x70] sm:$0xff] %v235
    %438 = vst [vmem:[#allocation10 + $0x78] sm:$0xff] %v236
    %439 = vst [vmem:[#allocation10 + $0x80] sm:$0xff] %v237
    %440 = vst [vmem:[#allocation10 + $0x88] sm:$0xff] %v238
    %441 = vst [vmem:[#allocation10 + $0x90] sm:$0xff] %v239
    %442 = vst [vmem:[#allocation10 + $0x98] sm:$0xff] %v240
    %443 = vst [vmem:[#allocation10 + $0xa0] sm:$0xff] %v241
    %444 = vst [vmem:[#allocation10 + $0xa8] sm:$0xff] %v242
    %445 = vst [vmem:[#allocation10 + $0xb0] sm:$0xff] %v243
    %446 = vst [vmem:[#allocation10 + $0xb8] sm:$0xff] %v244
    %447 = vst [vmem:[#allocation10 + $0xc0] sm:$0xff] %v245
    %448 = vst [vmem:[#allocation10 + $0xc8] sm:$0xff] %v246
    %449 = vst [vmem:[#allocation10 + $0xd0] sm:$0xff] %v247
    %450 = vst [vmem:[#allocation10 + $0xd8] sm:$0xff] %v248
    %451 = vst [vmem:[#allocation10 + $0xe0] sm:$0xff] %v249
    %452 = vst [vmem:[#allocation10 + $0xe8] sm:$0xff] %v250
    %453 = vst [vmem:[#allocation10 + $0xf0] sm:$0xff] %v251
    %454 = vst [vmem:[#allocation10 + $0xf8] sm:$0xff] %v252
    %v455 = vlaneseq
    %vm456 = vcmp.ge.s32.totalorder %v455, 0
    %vm457 = vcmp.lt.s32.totalorder %v455, 256
    %vm458 = vmand %vm456, %vm457
    %459 = vst.msk [vmem:[#allocation11] sm:$0x3] %vm458, %v257
    %460 = vst [vmem:[#allocation13] sm:$0xff] %v386
    %461 = vst [vmem:[#allocation13 + $0x8] sm:$0xff] %v387
    %462 = vst [vmem:[#allocation13 + $0x10] sm:$0xff] %v388
    %463 = vst [vmem:[#allocation13 + $0x18] sm:$0xff] %v389
    %464 = vst [vmem:[#allocation13 + $0x20] sm:$0xff] %v390
    %465 = vst [vmem:[#allocation13 + $0x28] sm:$0xff] %v391
    %466 = vst [vmem:[#allocation13 + $0x30] sm:$0xff] %v392
    %467 = vst [vmem:[#allocation13 + $0x38] sm:$0xff] %v393
    %468 = vst [vmem:[#allocation13 + $0x40] sm:$0xff] %v394
    %469 = vst [vmem:[#allocation13 + $0x48] sm:$0xff] %v395
    %470 = vst [vmem:[#allocation13 + $0x50] sm:$0xff] %v396
    %471 = vst [vmem:[#allocation13 + $0x58] sm:$0xff] %v397
    %472 = vst [vmem:[#allocation13 + $0x60] sm:$0xff] %v398
    %473 = vst [vmem:[#allocation13 + $0x68] sm:$0xff] %v399
    %474 = vst [vmem:[#allocation13 + $0x70] sm:$0xff] %v400
    %475 = vst [vmem:[#allocation13 + $0x78] sm:$0xff] %v401
    %476 = vst [vmem:[#allocation13 + $0x80] sm:$0xff] %v402
    %477 = vst [vmem:[#allocation13 + $0x88] sm:$0xff] %v403
    %478 = vst [vmem:[#allocation13 + $0x90] sm:$0xff] %v404
    %479 = vst [vmem:[#allocation13 + $0x98] sm:$0xff] %v405
    %480 = vst [vmem:[#allocation13 + $0xa0] sm:$0xff] %v406
    %481 = vst [vmem:[#allocation13 + $0xa8] sm:$0xff] %v407
    %482 = vst [vmem:[#allocation13 + $0xb0] sm:$0xff] %v408
    %483 = vst [vmem:[#allocation13 + $0xb8] sm:$0xff] %v409
    %484 = vst [vmem:[#allocation13 + $0xc0] sm:$0xff] %v410
    %485 = vst [vmem:[#allocation13 + $0xc8] sm:$0xff] %v411
    %486 = vst [vmem:[#allocation13 + $0xd0] sm:$0xff] %v412
    %487 = vst [vmem:[#allocation13 + $0xd8] sm:$0xff] %v413
    %488 = vst [vmem:[#allocation13 + $0xe0] sm:$0xff] %v414
    %489 = vst [vmem:[#allocation13 + $0xe8] sm:$0xff] %v415
    %490 = vst [vmem:[#allocation13 + $0xf0] sm:$0xff] %v416
    %491 = vst [vmem:[#allocation13 + $0xf8] sm:$0xff] %v417
    %492 = vst [vmem:[#allocation14] sm:$0x1] %v422
    %v493 = vld [vmem:[%s0] sm:$0xff]
    %v494 = vld [vmem:[%s0 + $0x8] sm:$0xff]
    %v495 = vld [vmem:[%s0 + $0x10] sm:$0xff]
    %v496 = vld [vmem:[%s0 + $0x18] sm:$0xff]
    %v497 = vld [vmem:[%s0 + $0x20] sm:$0xff]
    %v498 = vld [vmem:[%s0 + $0x28] sm:$0xff]
    %v499 = vld [vmem:[%s0 + $0x30] sm:$0xff]
    %v500 = vld [vmem:[%s0 + $0x38] sm:$0xff]
    %v501 = vld [vmem:[%s0 + $0x40] sm:$0xff]
    %v502 = vld [vmem:[%s0 + $0x48] sm:$0xff]
    %v503 = vld [vmem:[%s0 + $0x50] sm:$0xff]
    %v504 = vld [vmem:[%s0 + $0x58] sm:$0xff]
    %v505 = vld [vmem:[%s0 + $0x60] sm:$0xff]
    %v506 = vld [vmem:[%s0 + $0x68] sm:$0xff]
    %v507 = vld [vmem:[%s0 + $0x70] sm:$0xff]
    %v508 = vld [vmem:[%s0 + $0x78] sm:$0xff]
    %v509 = vld [vmem:[%s0 + $0x80] sm:$0xff]
    %v510 = vld [vmem:[%s0 + $0x88] sm:$0xff]
    %v511 = vld [vmem:[%s0 + $0x90] sm:$0xff]
    %v512 = vld [vmem:[%s0 + $0x98] sm:$0xff]
    %v513 = vld [vmem:[%s0 + $0xa0] sm:$0xff]
    %v514 = vld [vmem:[%s0 + $0xa8] sm:$0xff]
    %v515 = vld [vmem:[%s0 + $0xb0] sm:$0xff]
    %v516 = vld [vmem:[%s0 + $0xb8] sm:$0xff]
    %v517 = vld [vmem:[%s0 + $0xc0] sm:$0xff]
    %v518 = vld [vmem:[%s0 + $0xc8] sm:$0xff]
    %v519 = vld [vmem:[%s0 + $0xd0] sm:$0xff]
    %v520 = vld [vmem:[%s0 + $0xd8] sm:$0xff]
    %v521 = vld [vmem:[%s0 + $0xe0] sm:$0xff]
    %v522 = vld [vmem:[%s0 + $0xe8] sm:$0xff]
    %v523 = vld [vmem:[%s0 + $0xf0] sm:$0xff]
    %v524 = vld [vmem:[%s0 + $0xf8] sm:$0xff]
    %v525 = vpack.c.bf16 %v495, %v493
    %v526 = vpack.c.bf16 %v496, %v494
    %v527 = vpack.c.bf16 %v499, %v497
    %v528 = vpack.c.bf16 %v500, %v498
    %v529 = vpack.c.bf16 %v503, %v501
    %v530 = vpack.c.bf16 %v504, %v502
    %v531 = vpack.c.bf16 %v507, %v505
    %v532 = vpack.c.bf16 %v508, %v506
    %v533 = vpack.c.bf16 %v511, %v509
    %v534 = vpack.c.bf16 %v512, %v510
    %v535 = vpack.c.bf16 %v515, %v513
    %v536 = vpack.c.bf16 %v516, %v514
    %v537 = vpack.c.bf16 %v519, %v517
    %v538 = vpack.c.bf16 %v520, %v518
    %v539 = vpack.c.bf16 %v523, %v521
    %v540 = vpack.c.bf16 %v524, %v522
    %v557 = vunpack.c.l.b16 %v525
    %v558 = vunpack.c.l.b16 %v526
    %v559 = vunpack.c.h.b16 %v525
    %v560 = vunpack.c.h.b16 %v526
    %v561 = vunpack.c.l.b16 %v527
    %v562 = vunpack.c.l.b16 %v528
    %v563 = vunpack.c.h.b16 %v527
    %v564 = vunpack.c.h.b16 %v528
    %v565 = vunpack.c.l.b16 %v529
    %v566 = vunpack.c.l.b16 %v530
    %v567 = vunpack.c.h.b16 %v529
    %v568 = vunpack.c.h.b16 %v530
    %v569 = vunpack.c.l.b16 %v531
    %v570 = vunpack.c.l.b16 %v532
    %v571 = vunpack.c.h.b16 %v531
    %v572 = vunpack.c.h.b16 %v532
    %v573 = vunpack.c.l.b16 %v533
    %v574 = vunpack.c.l.b16 %v534
    %v575 = vunpack.c.h.b16 %v533
    %v576 = vunpack.c.h.b16 %v534
    %v577 = vunpack.c.l.b16 %v535
    %v578 = vunpack.c.l.b16 %v536
    %v579 = vunpack.c.h.b16 %v535
    %v580 = vunpack.c.h.b16 %v536
    %v581 = vunpack.c.l.b16 %v537
    %v582 = vunpack.c.l.b16 %v538
    %v583 = vunpack.c.h.b16 %v537
    %v584 = vunpack.c.h.b16 %v538
    %v585 = vunpack.c.l.b16 %v539
    %v586 = vunpack.c.l.b16 %v540
    %v587 = vunpack.c.h.b16 %v539
    %v588 = vunpack.c.h.b16 %v540
    %v589 = vpack.c.b16 %v558, %v557
    %v590 = vpack.c.b16 %v560, %v559
    %v591 = vpack.c.b16 %v562, %v561
    %v592 = vpack.c.b16 %v564, %v563
    %v593 = vpack.c.b16 %v566, %v565
    %v594 = vpack.c.b16 %v568, %v567
    %v595 = vpack.c.b16 %v570, %v569
    %v596 = vpack.c.b16 %v572, %v571
    %v597 = vpack.c.b16 %v574, %v573
    %v598 = vpack.c.b16 %v576, %v575
    %v599 = vpack.c.b16 %v578, %v577
    %v600 = vpack.c.b16 %v580, %v579
    %v601 = vpack.c.b16 %v582, %v581
    %v602 = vpack.c.b16 %v584, %v583
    %v603 = vpack.c.b16 %v586, %v585
    %v604 = vpack.c.b16 %v588, %v587
    %621 = vst [vmem:[#allocation16] sm:$0xff] %v589
    %622 = vst [vmem:[#allocation16 + $0x8] sm:$0xff] %v590
    %623 = vst [vmem:[#allocation16 + $0x10] sm:$0xff] %v591
    %624 = vst [vmem:[#allocation16 + $0x18] sm:$0xff] %v592
    %625 = vst [vmem:[#allocation16 + $0x20] sm:$0xff] %v593
    %626 = vst [vmem:[#allocation16 + $0x28] sm:$0xff] %v594
    %627 = vst [vmem:[#allocation16 + $0x30] sm:$0xff] %v595
    %628 = vst [vmem:[#allocation16 + $0x38] sm:$0xff] %v596
    %629 = vst [vmem:[#allocation16 + $0x40] sm:$0xff] %v597
    %630 = vst [vmem:[#allocation16 + $0x48] sm:$0xff] %v598
    %631 = vst [vmem:[#allocation16 + $0x50] sm:$0xff] %v599
    %632 = vst [vmem:[#allocation16 + $0x58] sm:$0xff] %v600
    %633 = vst [vmem:[#allocation16 + $0x60] sm:$0xff] %v601
    %634 = vst [vmem:[#allocation16 + $0x68] sm:$0xff] %v602
    %635 = vst [vmem:[#allocation16 + $0x70] sm:$0xff] %v603
    %636 = vst [vmem:[#allocation16 + $0x78] sm:$0xff] %v604
    %v637 = vld [vmem:[%s2] sm:$0xff]
    %v638 = vld [vmem:[%s2 + $0x8] sm:$0xff]
    %v639 = vld [vmem:[%s2 + $0x10] sm:$0xff]
    %v640 = vld [vmem:[%s2 + $0x18] sm:$0xff]
    %v641 = vld [vmem:[%s2 + $0x20] sm:$0xff]
    %v642 = vld [vmem:[%s2 + $0x28] sm:$0xff]
    %v643 = vld [vmem:[%s2 + $0x30] sm:$0xff]
    %v644 = vld [vmem:[%s2 + $0x38] sm:$0xff]
    %v645 = vld [vmem:[%s2 + $0x40] sm:$0xff]
    %v646 = vld [vmem:[%s2 + $0x48] sm:$0xff]
    %v647 = vld [vmem:[%s2 + $0x50] sm:$0xff]
    %v648 = vld [vmem:[%s2 + $0x58] sm:$0xff]
    %v649 = vld [vmem:[%s2 + $0x60] sm:$0xff]
    %v650 = vld [vmem:[%s2 + $0x68] sm:$0xff]
    %v651 = vld [vmem:[%s2 + $0x70] sm:$0xff]
    %v652 = vld [vmem:[%s2 + $0x78] sm:$0xff]
    %v653 = vld [vmem:[%s2 + $0x80] sm:$0xff]
    %v654 = vld [vmem:[%s2 + $0x88] sm:$0xff]
    %v655 = vld [vmem:[%s2 + $0x90] sm:$0xff]
    %v656 = vld [vmem:[%s2 + $0x98] sm:$0xff]
    %v657 = vld [vmem:[%s2 + $0xa0] sm:$0xff]
    %v658 = vld [vmem:[%s2 + $0xa8] sm:$0xff]
    %v659 = vld [vmem:[%s2 + $0xb0] sm:$0xff]
    %v660 = vld [vmem:[%s2 + $0xb8] sm:$0xff]
    %v661 = vld [vmem:[%s2 + $0xc0] sm:$0xff]
    %v662 = vld [vmem:[%s2 + $0xc8] sm:$0xff]
    %v663 = vld [vmem:[%s2 + $0xd0] sm:$0xff]
    %v664 = vld [vmem:[%s2 + $0xd8] sm:$0xff]
    %v665 = vld [vmem:[%s2 + $0xe0] sm:$0xff]
    %v666 = vld [vmem:[%s2 + $0xe8] sm:$0xff]
    %v667 = vld [vmem:[%s2 + $0xf0] sm:$0xff]
    %v668 = vld [vmem:[%s2 + $0xf8] sm:$0xff]
    %v669 = vpack.c.bf16 %v638, %v637
    %v670 = vpack.c.bf16 %v640, %v639
    %v671 = vpack.c.bf16 %v642, %v641
    %v672 = vpack.c.bf16 %v644, %v643
    %v673 = vpack.c.bf16 %v646, %v645
    %v674 = vpack.c.bf16 %v648, %v647
    %v675 = vpack.c.bf16 %v650, %v649
    %v676 = vpack.c.bf16 %v652, %v651
    %v677 = vpack.c.bf16 %v654, %v653
    %v678 = vpack.c.bf16 %v656, %v655
    %v679 = vpack.c.bf16 %v658, %v657
    %v680 = vpack.c.bf16 %v660, %v659
    %v681 = vpack.c.bf16 %v662, %v661
    %v682 = vpack.c.bf16 %v664, %v663
    %v683 = vpack.c.bf16 %v666, %v665
    %v684 = vpack.c.bf16 %v668, %v667
    %v701 = vunpack.c.l.b16 %v669
    %v702 = vunpack.c.h.b16 %v669
    %v703 = vunpack.c.l.b16 %v670
    %v704 = vunpack.c.h.b16 %v670
    %v705 = vunpack.c.l.b16 %v671
    %v706 = vunpack.c.h.b16 %v671
    %v707 = vunpack.c.l.b16 %v672
    %v708 = vunpack.c.h.b16 %v672
    %v709 = vunpack.c.l.b16 %v673
    %v710 = vunpack.c.h.b16 %v673
    %v711 = vunpack.c.l.b16 %v674
    %v712 = vunpack.c.h.b16 %v674
    %v713 = vunpack.c.l.b16 %v675
    %v714 = vunpack.c.h.b16 %v675
    %v715 = vunpack.c.l.b16 %v676
    %v716 = vunpack.c.h.b16 %v676
    %v717 = vunpack.c.l.b16 %v677
    %v718 = vunpack.c.h.b16 %v677
    %v719 = vunpack.c.l.b16 %v678
    %v720 = vunpack.c.h.b16 %v678
    %v721 = vunpack.c.l.b16 %v679
    %v722 = vunpack.c.h.b16 %v679
    %v723 = vunpack.c.l.b16 %v680
    %v724 = vunpack.c.h.b16 %v680
    %v725 = vunpack.c.l.b16 %v681
    %v726 = vunpack.c.h.b16 %v681
    %v727 = vunpack.c.l.b16 %v682
    %v728 = vunpack.c.h.b16 %v682
    %v729 = vunpack.c.l.b16 %v683
    %v730 = vunpack.c.h.b16 %v683
    %v731 = vunpack.c.l.b16 %v684
    %v732 = vunpack.c.h.b16 %v684
    %v733 = vpack.c.b16 %v701, %v701
    %v734 = vpack.c.b16 %v702, %v702
    %v735 = vpack.c.b16 %v703, %v703
    %v736 = vpack.c.b16 %v704, %v704
    %v737 = vpack.c.b16 %v705, %v705
    %v738 = vpack.c.b16 %v706, %v706
    %v739 = vpack.c.b16 %v707, %v707
    %v740 = vpack.c.b16 %v708, %v708
    %v741 = vpack.c.b16 %v709, %v709
    %v742 = vpack.c.b16 %v710, %v710
    %v743 = vpack.c.b16 %v711, %v711
    %v744 = vpack.c.b16 %v712, %v712
    %v745 = vpack.c.b16 %v713, %v713
    %v746 = vpack.c.b16 %v714, %v714
    %v747 = vpack.c.b16 %v715, %v715
    %v748 = vpack.c.b16 %v716, %v716
    %v749 = vpack.c.b16 %v717, %v717
    %v750 = vpack.c.b16 %v718, %v718
    %v751 = vpack.c.b16 %v719, %v719
    %v752 = vpack.c.b16 %v720, %v720
    %v753 = vpack.c.b16 %v721, %v721
    %v754 = vpack.c.b16 %v722, %v722
    %v755 = vpack.c.b16 %v723, %v723
    %v756 = vpack.c.b16 %v724, %v724
    %v757 = vpack.c.b16 %v725, %v725
    %v758 = vpack.c.b16 %v726, %v726
    %v759 = vpack.c.b16 %v727, %v727
    %v760 = vpack.c.b16 %v728, %v728
    %v761 = vpack.c.b16 %v729, %v729
    %v762 = vpack.c.b16 %v730, %v730
    %v763 = vpack.c.b16 %v731, %v731
    %v764 = vpack.c.b16 %v732, %v732
    %797 = vst [vmem:[#allocation17] sm:$0xf] %v733
    %798 = vst [vmem:[#allocation17 + $0x4] sm:$0xf] %v734
    %799 = vst [vmem:[#allocation17 + $0x8] sm:$0xf] %v735
    %800 = vst [vmem:[#allocation17 + $0xc] sm:$0xf] %v736
    %801 = vst [vmem:[#allocation17 + $0x10] sm:$0xf] %v737
    %802 = vst [vmem:[#allocation17 + $0x14] sm:$0xf] %v738
    %803 = vst [vmem:[#allocation17 + $0x18] sm:$0xf] %v739
    %804 = vst [vmem:[#allocation17 + $0x1c] sm:$0xf] %v740
    %805 = vst [vmem:[#allocation17 + $0x20] sm:$0xf] %v741
    %806 = vst [vmem:[#allocation17 + $0x24] sm:$0xf] %v742
    %807 = vst [vmem:[#allocation17 + $0x28] sm:$0xf] %v743
    %808 = vst [vmem:[#allocation17 + $0x2c] sm:$0xf] %v744
    %809 = vst [vmem:[#allocation17 + $0x30] sm:$0xf] %v745
    %810 = vst [vmem:[#allocation17 + $0x34] sm:$0xf] %v746
    %811 = vst [vmem:[#allocation17 + $0x38] sm:$0xf] %v747
    %812 = vst [vmem:[#allocation17 + $0x3c] sm:$0xf] %v748
    %813 = vst [vmem:[#allocation17 + $0x40] sm:$0xf] %v749
    %814 = vst [vmem:[#allocation17 + $0x44] sm:$0xf] %v750
    %815 = vst [vmem:[#allocation17 + $0x48] sm:$0xf] %v751
    %816 = vst [vmem:[#allocation17 + $0x4c] sm:$0xf] %v752
    %817 = vst [vmem:[#allocation17 + $0x50] sm:$0xf] %v753
    %818 = vst [vmem:[#allocation17 + $0x54] sm:$0xf] %v754
    %819 = vst [vmem:[#allocation17 + $0x58] sm:$0xf] %v755
    %820 = vst [vmem:[#allocation17 + $0x5c] sm:$0xf] %v756
    %821 = vst [vmem:[#allocation17 + $0x60] sm:$0xf] %v757
    %822 = vst [vmem:[#allocation17 + $0x64] sm:$0xf] %v758
    %823 = vst [vmem:[#allocation17 + $0x68] sm:$0xf] %v759
    %824 = vst [vmem:[#allocation17 + $0x6c] sm:$0xf] %v760
    %825 = vst [vmem:[#allocation17 + $0x70] sm:$0xf] %v761
    %826 = vst [vmem:[#allocation17 + $0x74] sm:$0xf] %v762
    %827 = vst [vmem:[#allocation17 + $0x78] sm:$0xf] %v763
    %828 = vst [vmem:[#allocation17 + $0x7c] sm:$0xf] %v764
    %v829 = vpack.c.bf16 %v223, %v221
    %v830 = vpack.c.bf16 %v224, %v222
    %v831 = vpack.c.bf16 %v227, %v225
    %v832 = vpack.c.bf16 %v228, %v226
    %v833 = vpack.c.bf16 %v231, %v229
    %v834 = vpack.c.bf16 %v232, %v230
    %v835 = vpack.c.bf16 %v235, %v233
    %v836 = vpack.c.bf16 %v236, %v234
    %v837 = vpack.c.bf16 %v239, %v237
    %v838 = vpack.c.bf16 %v240, %v238
    %v839 = vpack.c.bf16 %v243, %v241
    %v840 = vpack.c.bf16 %v244, %v242
    %v841 = vpack.c.bf16 %v247, %v245
    %v842 = vpack.c.bf16 %v248, %v246
    %v843 = vpack.c.bf16 %v251, %v249
    %v844 = vpack.c.bf16 %v252, %v250
    %v861 = vunpack.c.l.b16 %v829
    %v862 = vunpack.c.l.b16 %v830
    %v863 = vunpack.c.h.b16 %v829
    %v864 = vunpack.c.h.b16 %v830
    %v865 = vunpack.c.l.b16 %v831
    %v866 = vunpack.c.l.b16 %v832
    %v867 = vunpack.c.h.b16 %v831
    %v868 = vunpack.c.h.b16 %v832
    %v869 = vunpack.c.l.b16 %v833
    %v870 = vunpack.c.l.b16 %v834
    %v871 = vunpack.c.h.b16 %v833
    %v872 = vunpack.c.h.b16 %v834
    %v873 = vunpack.c.l.b16 %v835
    %v874 = vunpack.c.l.b16 %v836
    %v875 = vunpack.c.h.b16 %v835
    %v876 = vunpack.c.h.b16 %v836
    %v877 = vunpack.c.l.b16 %v837
    %v878 = vunpack.c.l.b16 %v838
    %v879 = vunpack.c.h.b16 %v837
    %v880 = vunpack.c.h.b16 %v838
    %v881 = vunpack.c.l.b16 %v839
    %v882 = vunpack.c.l.b16 %v840
    %v883 = vunpack.c.h.b16 %v839
    %v884 = vunpack.c.h.b16 %v840
    %v885 = vunpack.c.l.b16 %v841
    %v886 = vunpack.c.l.b16 %v842
    %v887 = vunpack.c.h.b16 %v841
    %v888 = vunpack.c.h.b16 %v842
    %v889 = vunpack.c.l.b16 %v843
    %v890 = vunpack.c.l.b16 %v844
    %v891 = vunpack.c.h.b16 %v843
    %v892 = vunpack.c.h.b16 %v844
    %v893 = vpack.c.b16 %v862, %v861
    %v894 = vpack.c.b16 %v864, %v863
    %v895 = vpack.c.b16 %v866, %v865
    %v896 = vpack.c.b16 %v868, %v867
    %v897 = vpack.c.b16 %v870, %v869
    %v898 = vpack.c.b16 %v872, %v871
    %v899 = vpack.c.b16 %v874, %v873
    %v900 = vpack.c.b16 %v876, %v875
    %v901 = vpack.c.b16 %v878, %v877
    %v902 = vpack.c.b16 %v880, %v879
    %v903 = vpack.c.b16 %v882, %v881
    %v904 = vpack.c.b16 %v884, %v883
    %v905 = vpack.c.b16 %v886, %v885
    %v906 = vpack.c.b16 %v888, %v887
    %v907 = vpack.c.b16 %v890, %v889
    %v908 = vpack.c.b16 %v892, %v891
    %925 = vst [vmem:[#allocation19] sm:$0xff] %v893
    %926 = vst [vmem:[#allocation19 + $0x8] sm:$0xff] %v894
    %927 = vst [vmem:[#allocation19 + $0x10] sm:$0xff] %v895
    %928 = vst [vmem:[#allocation19 + $0x18] sm:$0xff] %v896
    %929 = vst [vmem:[#allocation19 + $0x20] sm:$0xff] %v897
    %930 = vst [vmem:[#allocation19 + $0x28] sm:$0xff] %v898
    %931 = vst [vmem:[#allocation19 + $0x30] sm:$0xff] %v899
    %932 = vst [vmem:[#allocation19 + $0x38] sm:$0xff] %v900
    %933 = vst [vmem:[#allocation19 + $0x40] sm:$0xff] %v901
    %934 = vst [vmem:[#allocation19 + $0x48] sm:$0xff] %v902
    %935 = vst [vmem:[#allocation19 + $0x50] sm:$0xff] %v903
    %936 = vst [vmem:[#allocation19 + $0x58] sm:$0xff] %v904
    %937 = vst [vmem:[#allocation19 + $0x60] sm:$0xff] %v905
    %938 = vst [vmem:[#allocation19 + $0x68] sm:$0xff] %v906
    %939 = vst [vmem:[#allocation19 + $0x70] sm:$0xff] %v907
    %940 = vst [vmem:[#allocation19 + $0x78] sm:$0xff] %v908
    %v941 = vpack.c.bf16 %v387, %v386
    %v942 = vpack.c.bf16 %v389, %v388
    %v943 = vpack.c.bf16 %v391, %v390
    %v944 = vpack.c.bf16 %v393, %v392
    %v945 = vpack.c.bf16 %v395, %v394
    %v946 = vpack.c.bf16 %v397, %v396
    %v947 = vpack.c.bf16 %v399, %v398
    %v948 = vpack.c.bf16 %v401, %v400
    %v949 = vpack.c.bf16 %v403, %v402
    %v950 = vpack.c.bf16 %v405, %v404
    %v951 = vpack.c.bf16 %v407, %v406
    %v952 = vpack.c.bf16 %v409, %v408
    %v953 = vpack.c.bf16 %v411, %v410
    %v954 = vpack.c.bf16 %v413, %v412
    %v955 = vpack.c.bf16 %v415, %v414
    %v956 = vpack.c.bf16 %v417, %v416
    %v973 = vunpack.c.l.b16 %v941
    %v974 = vunpack.c.h.b16 %v941
    %v975 = vunpack.c.l.b16 %v942
    %v976 = vunpack.c.h.b16 %v942
    %v977 = vunpack.c.l.b16 %v943
    %v978 = vunpack.c.h.b16 %v943
    %v979 = vunpack.c.l.b16 %v944
    %v980 = vunpack.c.h.b16 %v944
    %v981 = vunpack.c.l.b16 %v945
    %v982 = vunpack.c.h.b16 %v945
    %v983 = vunpack.c.l.b16 %v946
    %v984 = vunpack.c.h.b16 %v946
    %v985 = vunpack.c.l.b16 %v947
    %v986 = vunpack.c.h.b16 %v947
    %v987 = vunpack.c.l.b16 %v948
    %v988 = vunpack.c.h.b16 %v948
    %v989 = vunpack.c.l.b16 %v949
    %v990 = vunpack.c.h.b16 %v949
    %v991 = vunpack.c.l.b16 %v950
    %v992 = vunpack.c.h.b16 %v950
    %v993 = vunpack.c.l.b16 %v951
    %v994 = vunpack.c.h.b16 %v951
    %v995 = vunpack.c.l.b16 %v952
    %v996 = vunpack.c.h.b16 %v952
    %v997 = vunpack.c.l.b16 %v953
    %v998 = vunpack.c.h.b16 %v953
    %v999 = vunpack.c.l.b16 %v954
    %v1000 = vunpack.c.h.b16 %v954
    %v1001 = vunpack.c.l.b16 %v955
    %v1002 = vunpack.c.h.b16 %v955
    %v1003 = vunpack.c.l.b16 %v956
    %v1004 = vunpack.c.h.b16 %v956
    %v1005 = vpack.c.b16 %v973, %v973
    %v1006 = vpack.c.b16 %v974, %v974
    %v1007 = vpack.c.b16 %v975, %v975
    %v1008 = vpack.c.b16 %v976, %v976
    %v1009 = vpack.c.b16 %v977, %v977
    %v1010 = vpack.c.b16 %v978, %v978
    %v1011 = vpack.c.b16 %v979, %v979
    %v1012 = vpack.c.b16 %v980, %v980
    %v1013 = vpack.c.b16 %v981, %v981
    %v1014 = vpack.c.b16 %v982, %v982
    %v1015 = vpack.c.b16 %v983, %v983
    %v1016 = vpack.c.b16 %v984, %v984
    %v1017 = vpack.c.b16 %v985, %v985
    %v1018 = vpack.c.b16 %v986, %v986
    %v1019 = vpack.c.b16 %v987, %v987
    %v1020 = vpack.c.b16 %v988, %v988
    %v1021 = vpack.c.b16 %v989, %v989
    %v1022 = vpack.c.b16 %v990, %v990
    %v1023 = vpack.c.b16 %v991, %v991
    %v1024 = vpack.c.b16 %v992, %v992
    %v1025 = vpack.c.b16 %v993, %v993
    %v1026 = vpack.c.b16 %v994, %v994
    %v1027 = vpack.c.b16 %v995, %v995
    %v1028 = vpack.c.b16 %v996, %v996
    %v1029 = vpack.c.b16 %v997, %v997
    %v1030 = vpack.c.b16 %v998, %v998
    %v1031 = vpack.c.b16 %v999, %v999
    %v1032 = vpack.c.b16 %v1000, %v1000
    %v1033 = vpack.c.b16 %v1001, %v1001
    %v1034 = vpack.c.b16 %v1002, %v1002
    %v1035 = vpack.c.b16 %v1003, %v1003
    %v1036 = vpack.c.b16 %v1004, %v1004
    %1069 = vst [vmem:[#allocation20] sm:$0xf] %v1005
    %1070 = vst [vmem:[#allocation20 + $0x4] sm:$0xf] %v1006
    %1071 = vst [vmem:[#allocation20 + $0x8] sm:$0xf] %v1007
    %1072 = vst [vmem:[#allocation20 + $0xc] sm:$0xf] %v1008
    %1073 = vst [vmem:[#allocation20 + $0x10] sm:$0xf] %v1009
    %1074 = vst [vmem:[#allocation20 + $0x14] sm:$0xf] %v1010
    %1075 = vst [vmem:[#allocation20 + $0x18] sm:$0xf] %v1011
    %1076 = vst [vmem:[#allocation20 + $0x1c] sm:$0xf] %v1012
    %1077 = vst [vmem:[#allocation20 + $0x20] sm:$0xf] %v1013
    %1078 = vst [vmem:[#allocation20 + $0x24] sm:$0xf] %v1014
    %1079 = vst [vmem:[#allocation20 + $0x28] sm:$0xf] %v1015
    %1080 = vst [vmem:[#allocation20 + $0x2c] sm:$0xf] %v1016
    %1081 = vst [vmem:[#allocation20 + $0x30] sm:$0xf] %v1017
    %1082 = vst [vmem:[#allocation20 + $0x34] sm:$0xf] %v1018
    %1083 = vst [vmem:[#allocation20 + $0x38] sm:$0xf] %v1019
    %1084 = vst [vmem:[#allocation20 + $0x3c] sm:$0xf] %v1020
    %1085 = vst [vmem:[#allocation20 + $0x40] sm:$0xf] %v1021
    %1086 = vst [vmem:[#allocation20 + $0x44] sm:$0xf] %v1022
    %1087 = vst [vmem:[#allocation20 + $0x48] sm:$0xf] %v1023
    %1088 = vst [vmem:[#allocation20 + $0x4c] sm:$0xf] %v1024
    %1089 = vst [vmem:[#allocation20 + $0x50] sm:$0xf] %v1025
    %1090 = vst [vmem:[#allocation20 + $0x54] sm:$0xf] %v1026
    %1091 = vst [vmem:[#allocation20 + $0x58] sm:$0xf] %v1027
    %1092 = vst [vmem:[#allocation20 + $0x5c] sm:$0xf] %v1028
    %1093 = vst [vmem:[#allocation20 + $0x60] sm:$0xf] %v1029
    %1094 = vst [vmem:[#allocation20 + $0x64] sm:$0xf] %v1030
    %1095 = vst [vmem:[#allocation20 + $0x68] sm:$0xf] %v1031
    %1096 = vst [vmem:[#allocation20 + $0x6c] sm:$0xf] %v1032
    %1097 = vst [vmem:[#allocation20 + $0x70] sm:$0xf] %v1033
    %1098 = vst [vmem:[#allocation20 + $0x74] sm:$0xf] %v1034
    %1099 = vst [vmem:[#allocation20 + $0x78] sm:$0xf] %v1035
    %1100 = vst [vmem:[#allocation20 + $0x7c] sm:$0xf] %v1036
    // Predicated region
    $region50: #{tpu_custom_call.1} parent=1 // pred_check
      _
    $region51: #{tpu_custom_call.1} parent=1 // pred_check_branch
      %1102 = sbr.rel (0) target = $region53
    $region52: #{tpu_custom_call.1} parent=1 // pred_region
      %s1104 = ssub.s32 4096, 4096
      %1105 = vsyncadd [#allocation4], %s1104
      %s1106 = sshll.u32 [#allocation10], 4
      %s1107 = int_to_ptr.vmem [resolvable:$true] %s1106
      %1112 = dma.vmem_to_hbm [thread:$0]  %s1107, 4096, %s8, [#allocation4], 256, 256, 16
    $region53: #{tpu_custom_call.1} parent=1 // pred_fallthru
      _
    // Predicated region
    $region54: #{tpu_custom_call.1} parent=1 // pred_check
      _
    $region55: #{tpu_custom_call.1} parent=1 // pred_check_branch
      %1114 = sbr.rel (0) target = $region57
    $region56: #{tpu_custom_call.1} parent=1 // pred_region
      %s1116 = ssub.s32 32, 32
      %1117 = vsyncadd [#allocation12], %s1116
      %s1119 = sshll.u32 [#allocation11], 4
      %s1120 = int_to_ptr.vmem [resolvable:$true] %s1119
      %1122 = dma.vmem_to_hbm [thread:$0]  %s1120, 32, %s9, [#allocation12]
    $region57: #{tpu_custom_call.1} parent=1 // pred_fallthru
      _
    // Predicated region
    $region58: #{tpu_custom_call.1} parent=1 // pred_check
      _
    $region59: #{tpu_custom_call.1} parent=1 // pred_check_branch
      %1124 = sbr.rel (0) target = $region61
    $region60: #{tpu_custom_call.1} parent=1 // pred_region
      %s1126 = ssub.s32 4096, 4096
      %1127 = vsyncadd [#allocation12], %s1126
      %s1128 = sshll.u32 [#allocation13], 4
      %s1129 = int_to_ptr.vmem [resolvable:$true] %s1128
      %1134 = dma.vmem_to_hbm [thread:$0]  %s1129, 4096, %s10, [#allocation12], 128, 128, 8
    $region61: #{tpu_custom_call.1} parent=1 // pred_fallthru
      _
    // Predicated region
    $region62: #{tpu_custom_call.1} parent=1 // pred_check
      _
    $region63: #{tpu_custom_call.1} parent=1 // pred_check_branch
      %1136 = sbr.rel (0) target = $region65
    $region64: #{tpu_custom_call.1} parent=1 // pred_region
      %s1138 = ssub.s32 16, 16
      %1139 = vsyncadd [#allocation15], %s1138
      %s1141 = sshll.u32 [#allocation14], 4
      %s1142 = int_to_ptr.vmem [resolvable:$true] %s1141
      %1144 = dma.vmem_to_hbm [thread:$0]  %s1142, 16, %s11, [#allocation15]
    $region65: #{tpu_custom_call.1} parent=1 // pred_fallthru
      _
    // Predicated region
    $region66: #{tpu_custom_call.1} parent=1 // pred_check
      _
    $region67: #{tpu_custom_call.1} parent=1 // pred_check_branch
      %1146 = sbr.rel (0) target = $region69
    $region68: #{tpu_custom_call.1} parent=1 // pred_region
      %s1148 = ssub.s32 2048, 2048
      %1149 = vsyncadd [#allocation15], %s1148
      %s1150 = sshll.u32 [#allocation16], 4
      %s1151 = int_to_ptr.vmem [resolvable:$true] %s1150
      %1156 = dma.vmem_to_hbm [thread:$0]  %s1151, 2048, %s12, [#allocation15], 128, 128, 8
    $region69: #{tpu_custom_call.1} parent=1 // pred_fallthru
      _
    // Predicated region
    $region70: #{tpu_custom_call.1} parent=1 // pred_check
      _
    $region71: #{tpu_custom_call.1} parent=1 // pred_check_branch
      %1158 = sbr.rel (0) target = $region73
    $region72: #{tpu_custom_call.1} parent=1 // pred_region
      %s1160 = ssub.s32 2048, 2048
      %1161 = vsyncadd [#allocation18], %s1160
      %s1162 = sshll.u32 [#allocation17], 4
      %s1163 = int_to_ptr.vmem [resolvable:$true] %s1162
      %1168 = dma.vmem_to_hbm [thread:$0]  %s1163, 2048, %s13, [#allocation18], 64, 64, 4
    $region73: #{tpu_custom_call.1} parent=1 // pred_fallthru
      _
    // Predicated region
    $region74: #{tpu_custom_call.1} parent=1 // pred_check
      _
    $region75: #{tpu_custom_call.1} parent=1 // pred_check_branch
      %1170 = sbr.rel (0) target = $region77
    $region76: #{tpu_custom_call.1} parent=1 // pred_region
      %s1172 = ssub.s32 2048, 2048
      %1173 = vsyncadd [#allocation18], %s1172
      %s1174 = sshll.u32 [#allocation19], 4
      %s1175 = int_to_ptr.vmem [resolvable:$true] %s1174
      %1180 = dma.vmem_to_hbm [thread:$0]  %s1175, 2048, %s14, [#allocation18], 128, 128, 8
    $region77: #{tpu_custom_call.1} parent=1 // pred_fallthru
      _
    // Predicated region
    $region78: #{tpu_custom_call.1} parent=1 // pred_check
      _
    $region79: #{tpu_custom_call.1} parent=1 // pred_check_branch
      %1182 = sbr.rel (0) target = $region81
    $region80: #{tpu_custom_call.1} parent=1 // pred_region
      %s1184 = ssub.s32 2048, 2048
      %1185 = vsyncadd [#allocation21], %s1184
      %s1186 = sshll.u32 [#allocation20], 4
      %s1187 = int_to_ptr.vmem [resolvable:$true] %s1186
      %1192 = dma.vmem_to_hbm [thread:$0]  %s1187, 2048, %s15, [#allocation21], 64, 64, 4
    $region81: #{tpu_custom_call.1} parent=1 // pred_fallthru
      _
    // Predicated region
    $region82: #{tpu_custom_call.1} parent=1 // pred_check
      _
    $region83: #{tpu_custom_call.1} parent=1 // pred_check_branch
      %1194 = sbr.rel (0) target = $region85
    $region84: #{tpu_custom_call.1} parent=1 // pred_region
      %1195 = dma.done [#allocation4], 4096
    $region85: #{tpu_custom_call.1} parent=1 // pred_fallthru
      _
    // Predicated region
    $region86: #{tpu_custom_call.1} parent=1 // pred_check
      _
    $region87: #{tpu_custom_call.1} parent=1 // pred_check_branch
      %1197 = sbr.rel (0) target = $region89
    $region88: #{tpu_custom_call.1} parent=1 // pred_region
      %1198 = dma.done [#allocation12], 32
    $region89: #{tpu_custom_call.1} parent=1 // pred_fallthru
      _
    // Predicated region
    $region90: #{tpu_custom_call.1} parent=1 // pred_check
      _
    $region91: #{tpu_custom_call.1} parent=1 // pred_check_branch
      %1200 = sbr.rel (0) target = $region93
    $region92: #{tpu_custom_call.1} parent=1 // pred_region
      %1201 = dma.done [#allocation12], 4096
    $region93: #{tpu_custom_call.1} parent=1 // pred_fallthru
      _
    // Predicated region
    $region94: #{tpu_custom_call.1} parent=1 // pred_check
      _
    $region95: #{tpu_custom_call.1} parent=1 // pred_check_branch
      %1203 = sbr.rel (0) target = $region97
    $region96: #{tpu_custom_call.1} parent=1 // pred_region
      %1204 = dma.done [#allocation15], 16
    $region97: #{tpu_custom_call.1} parent=1 // pred_fallthru
      _
    // Predicated region
    $region98: #{tpu_custom_call.1} parent=1 // pred_check
      _
    $region99: #{tpu_custom_call.1} parent=1 // pred_check_branch
      %1206 = sbr.rel (0) target = $region101
    $region100: #{tpu_custom_call.1} parent=1 // pred_region
      %1207 = dma.done [#allocation15], 2048
    $region101: #{tpu_custom_call.1} parent=1 // pred_fallthru
      _
    // Predicated region
    $region102: #{tpu_custom_call.1} parent=1 // pred_check
      _
    $region103: #{tpu_custom_call.1} parent=1 // pred_check_branch
      %1209 = sbr.rel (0) target = $region105
    $region104: #{tpu_custom_call.1} parent=1 // pred_region
      %1210 = dma.done [#allocation18], 2048
    $region105: #{tpu_custom_call.1} parent=1 // pred_fallthru
      _
    // Predicated region
    $region106: #{tpu_custom_call.1} parent=1 // pred_check
      _
    $region107: #{tpu_custom_call.1} parent=1 // pred_check_branch
      %1212 = sbr.rel (0) target = $region109
    $region108: #{tpu_custom_call.1} parent=1 // pred_region
      %1213 = dma.done [#allocation18], 2048
    $region109: #{tpu_custom_call.1} parent=1 // pred_fallthru
      _
    // Predicated region
    $region110: #{tpu_custom_call.1} parent=1 // pred_check
      _
    $region111: #{tpu_custom_call.1} parent=1 // pred_check_branch
      %1215 = sbr.rel (0) target = $region113
    $region112: #{tpu_custom_call.1} parent=1 // pred_region
      %1216 = dma.done [#allocation21], 2048
    $region113: #{tpu_custom_call.1} parent=1 // pred_fallthru
      _
    %1217 = vsyncpa [#allocation3], 1
    %1218 = vsyncpa [#allocation6], 1
    %1219 = vsyncpa [#allocation9], 1
    %1220 = vsyncpa [#allocation4], 1
    %1221 = vsyncpa [#allocation12], 1
    %1222 = vsyncpa [#allocation15], 1
    %1223 = vsyncpa [#allocation18], 1
    %1224 = vsyncpa [#allocation21], 1

</llo_original>
